<compile_context>
chip_gen: v6e
topology: v6e:2x2x1
jax: 0.10.0
libtpu: 0.0.40
codegen_flags: <defaults>
</compile_context>

<pallas_src>
import functools

import jax
import jax.numpy as jnp
import numpy as np
from jax import lax
from jax.experimental import pallas as pl
from jax.experimental.pallas import tpu as pltpu

_NEG_MASK = -1000000000.0  # same additive causal-mask value as the torch module


def _tile(dim: int, target: int) -> int:
    """Largest divisor of `dim` that is <= target (keeps blocks evenly dividing the array)."""
    t = min(dim, target)
    while dim % t:
        t -= 1
    return t


# ----------------------------------------------------------------------------
# Kernel 1: tiled linear projection  y = x @ W.T   (torch Linear weight layout (out, in)).
# ----------------------------------------------------------------------------
def _matmul_kernel(x_ref, w_ref, o_ref, acc_ref):
    @pl.when(pl.program_id(2) == 0)
    def _():
        acc_ref[...] = jnp.zeros_like(acc_ref)

    acc_ref[...] += lax.dot_general(
        x_ref[...], w_ref[...],
        dimension_numbers=(((1,), (1,)), ((), ())),   # contract x's K with w's K (w is (N, K))
        preferred_element_type=jnp.float32)

    @pl.when(pl.program_id(2) == pl.num_programs(2) - 1)
    def _():
        o_ref[...] = acc_ref[...].astype(o_ref.dtype)


def linear(x2d: jax.Array, w: jax.Array, *, tm: int = 256, tn: int = 256, tk: int = 512):
    """y = x2d @ w.T with torch.nn.Linear weight convention w: (out, in)."""
    M, K = x2d.shape
    N = w.shape[0]
    tm, tn, tk = _tile(M, tm), _tile(N, tn), _tile(K, tk)
    return pl.pallas_call(
        _matmul_kernel,
        out_shape=jax.ShapeDtypeStruct((M, N), x2d.dtype),
        grid=(M // tm, N // tn, K // tk),
        in_specs=[
            pl.BlockSpec((tm, tk), lambda i, j, k: (i, k)),
            pl.BlockSpec((tn, tk), lambda i, j, k: (j, k)),
        ],
        out_specs=pl.BlockSpec((tm, tn), lambda i, j, k: (i, j)),
        scratch_shapes=[pltpu.VMEM((tm, tn), jnp.float32)],
        compiler_params=pltpu.CompilerParams(
            dimension_semantics=("parallel", "parallel", "arbitrary")),
    )(x2d, w)


# ----------------------------------------------------------------------------
# Kernel 2: RoPE (interleaved pairs) from cos / signed-sin tables, scale folded into q.
# ----------------------------------------------------------------------------
def _rope_kernel(x_ref, cos_ref, sin_ref, perm_ref, o_ref, *, scale):
    x = x_ref[0, 0].astype(jnp.float32)                               # (tl, Hd)
    # pair-swap [x1,x0,x3,x2,...] via constant permutation on the MXU (robust for any Hd)
    swapped = jnp.dot(x, perm_ref[...], preferred_element_type=jnp.float32)
    rot = x * cos_ref[...] + swapped * sin_ref[...]
    if scale != 1.0:
        rot = rot * scale
    o_ref[0, 0] = rot.astype(o_ref.dtype)


def rope(x: jax.Array, cos_t: jax.Array, sin_t: jax.Array, perm: jax.Array,
         *, scale: float = 1.0, tl: int = 512):
    """x: (B, Hx, L, Hd).  Returns rotated (and optionally pre-scaled) tensor, same shape/dtype."""
    B, Hx, L, Hd = x.shape
    tl = _tile(L, tl)
    return pl.pallas_call(
        functools.partial(_rope_kernel, scale=scale),
        out_shape=jax.ShapeDtypeStruct(x.shape, x.dtype),
        grid=(B, Hx, L // tl),
        in_specs=[
            pl.BlockSpec((1, 1, tl, Hd), lambda b, h, l: (b, h, l, 0)),
            pl.BlockSpec((tl, Hd), lambda b, h, l: (l, 0)),
            pl.BlockSpec((tl, Hd), lambda b, h, l: (l, 0)),
            pl.BlockSpec((Hd, Hd), lambda b, h, l: (0, 0)),
        ],
        out_specs=pl.BlockSpec((1, 1, tl, Hd), lambda b, h, l: (b, h, l, 0)),
        compiler_params=pltpu.CompilerParams(
            dimension_semantics=("parallel", "parallel", "parallel")),
    )(x, cos_t, sin_t, perm)


# ----------------------------------------------------------------------------
# Kernel 3: flash attention with in-kernel causal mask and GQA via index_map.
# ----------------------------------------------------------------------------
def _flash_kernel(q_ref, k_ref, v_ref, o_ref, m_sc, l_sc, acc_sc, *, tq, tk):
    qi = pl.program_id(2)
    ki = pl.program_id(3)

    @pl.when(ki == 0)
    def _():
        m_sc[...] = jnp.full_like(m_sc, -jnp.inf)
        l_sc[...] = jnp.zeros_like(l_sc)
        acc_sc[...] = jnp.zeros_like(acc_sc)

    # Skip KV tiles that lie entirely in the causally-masked future (their softmax weight is 0).
    @pl.when(ki * tk <= qi * tq + (tq - 1))
    def _():
        q = q_ref[0, 0]     # (tq, Hd): rotated, pre-scaled by head_dim**-0.5
        k = k_ref[0, 0]     # (tk, Hd): rotated (shared KV head via index_map)
        v = v_ref[0, 0]     # (tk, Hd)
        s = lax.dot_general(q, k, dimension_numbers=(((1,), (1,)), ((), ())),
                            preferred_element_type=jnp.float32)          # (tq, tk)
        row = qi * tq + lax.broadcasted_iota(jnp.int32, (tq, tk), 0)
        col = ki * tk + lax.broadcasted_iota(jnp.int32, (tq, tk), 1)
        s = s + jnp.where(col > row, _NEG_MASK, 0.0)                     # causal mask, in-kernel

        m_prev = m_sc[...]
        m_new = jnp.maximum(m_prev, jnp.max(s, axis=-1, keepdims=True))
        alpha = jnp.exp(m_prev - m_new)
        p = jnp.exp(s - m_new)
        l_sc[...] = alpha * l_sc[...] + jnp.sum(p, axis=-1, keepdims=True)
        acc_sc[...] = alpha * acc_sc[...] + jnp.dot(
            p.astype(v.dtype), v, preferred_element_type=jnp.float32)
        m_sc[...] = m_new

    @pl.when(ki == pl.num_programs(3) - 1)
    def _():
        o_ref[0, 0] = (acc_sc[...] *
                       pl.reciprocal(l_sc[...], approx=True)).astype(o_ref.dtype)


def flash_attention(q: jax.Array, k: jax.Array, v: jax.Array, *,
                    repeats: int, tq: int = 256, tk: int = 256):
    """q: (B, H, L, Hd) rotated & pre-scaled; k, v: (B, Hkv, L, Hd).  Returns (B, H, L, Hd)."""
    B, H, L, Hd = q.shape
    tq, tk = _tile(L, tq), _tile(L, tk)
    q_spec = pl.BlockSpec((1, 1, tq, Hd), lambda b, h, qi, ki: (b, h, qi, 0))
    kv_spec = pl.BlockSpec((1, 1, tk, Hd), lambda b, h, qi, ki: (b, h // repeats, ki, 0))
    return pl.pallas_call(
        functools.partial(_flash_kernel, tq=tq, tk=tk),
        out_shape=jax.ShapeDtypeStruct((B, H, L, Hd), q.dtype),
        grid=(B, H, L // tq, L // tk),
        in_specs=[q_spec, kv_spec, kv_spec],
        out_specs=pl.BlockSpec((1, 1, tq, Hd), lambda b, h, qi, ki: (b, h, qi, 0)),
        scratch_shapes=[
            pltpu.VMEM((tq, 1), jnp.float32),   # running max m
            pltpu.VMEM((tq, 1), jnp.float32),   # running denom l
            pltpu.VMEM((tq, Hd), jnp.float32),  # output accumulator
        ],
        compiler_params=pltpu.CompilerParams(
            dimension_semantics=("parallel", "parallel", "parallel", "arbitrary")),
    )(q, k, v)


# ----------------------------------------------------------------------------
# RoPE table helpers (O(L*Hd) instead of the O(L*Hd^2) dense rotation matrix).
# ----------------------------------------------------------------------------
def create_rope_tables(positions, embedding_dim, rope_theta):
    """cos / signed-sin tables (L, Hd), mathematically equivalent to the dense rotation matrix."""
    i = jnp.arange(embedding_dim // 2)
    theta = rope_theta ** (-2.0 * i.astype(jnp.float32) / embedding_dim)
    m_theta = positions[:, None].astype(jnp.float32) * theta[None, :]    # (L, Hd//2)
    cos_v = jnp.cos(m_theta)
    sin_v = jnp.sin(m_theta)
    cos_t = jnp.repeat(cos_v, 2, axis=1)                                 # [c0,c0,c1,c1,...]
    sin_t = jnp.stack([-sin_v, sin_v], axis=-1).reshape(positions.shape[0], embedding_dim)
    return cos_t, sin_t


def _pair_swap_matrix(hd):
    """(Hd, Hd) permutation: (x @ P)[..., 2i] = x[..., 2i+1], (x @ P)[..., 2i+1] = x[..., 2i]."""
    p = np.zeros((hd, hd), np.float32)
    idx = np.arange(hd // 2)
    p[2 * idx + 1, 2 * idx] = 1.0
    p[2 * idx, 2 * idx + 1] = 1.0
    return jnp.asarray(p)


# ----------------------------------------------------------------------------
# Attention module glue (reshapes / parameter handling in plain JAX).
# ----------------------------------------------------------------------------
def attention_forward(x, rope_cos, rope_sin, weights, *, n_heads, n_kv_heads, head_dim):
    """Reproduces Attention.forward (cache=None path, additive causal mask applied in-kernel)."""
    B, L, D = x.shape
    repeats = n_heads // n_kv_heads
    scale = head_dim ** (-0.5)
    wq, wk, wv, wo = weights
    perm = _pair_swap_matrix(head_dim)

    x2d = x.reshape(B * L, D)
    q = linear(x2d, wq).reshape(B, L, n_heads, head_dim).transpose(0, 2, 1, 3)
    k = linear(x2d, wk).reshape(B, L, n_kv_heads, head_dim).transpose(0, 2, 1, 3)
    v = linear(x2d, wv).reshape(B, L, n_kv_heads, head_dim).transpose(0, 2, 1, 3)

    q_rot = rope(q, rope_cos, rope_sin, perm, scale=scale)   # softmax scale folded into q
    k_rot = rope(k, rope_cos, rope_sin, perm, scale=1.0)     # computed once per KV head

    out = flash_attention(q_rot, k_rot, v, repeats=repeats)

    out2d = out.transpose(0, 2, 1, 3).reshape(B * L, n_heads * head_dim)
    out = linear(out2d, wo).reshape(B, L, D)

    # Module-semantics cache: rotated + GQA-repeated keys/values, shape (B, n_heads, L, Hd).
    # The repeat is a cheap XLA broadcast (no redundant per-query-head kernel writeback).
    keys = jnp.repeat(k_rot, repeats, axis=1)
    values = jnp.repeat(v, repeats, axis=1)
    return out, (keys, values)


# ----------------------------------------------------------------------------
# Helpers mirroring the static methods of the PyTorch module (used by the reference only).
# ----------------------------------------------------------------------------
def create_additive_causal_mask(context_len, dtype=jnp.float32):
    idx = jnp.arange(context_len)
    return (idx[:, None] < idx[None, :]).astype(dtype) * _NEG_MASK


def create_rotation_matrix(positions, embedding_dim, rope_theta):
    L = positions.shape[0]
    i = jnp.arange(embedding_dim // 2)
    theta = rope_theta ** (-2.0 * i.astype(jnp.float32) / embedding_dim)
    m_theta = positions[:, None].astype(jnp.float32) * theta[None, :]
    cos_v, sin_v = jnp.cos(m_theta), jnp.sin(m_theta)
    R = jnp.zeros((L, embedding_dim, embedding_dim), jnp.float32)
    R = R.at[:, 2 * i, 2 * i].set(cos_v)
    R = R.at[:, 2 * i, 2 * i + 1].set(-sin_v)
    R = R.at[:, 2 * i + 1, 2 * i].set(sin_v)
    R = R.at[:, 2 * i + 1, 2 * i + 1].set(cos_v)
    return R


# ----------------------------------------------------------------------------
# Pure-JAX reference (dense rotation matrix + full softmax) for correctness check.
# ----------------------------------------------------------------------------
def reference_forward(x, R, mask, weights, *, n_heads, n_kv_heads, head_dim):
    B, L, D = x.shape
    repeats = n_heads // n_kv_heads
    scale = head_dim ** (-0.5)
    wq, wk, wv, wo = weights
    q = (x @ wq.T).reshape(B, L, n_heads, head_dim).transpose(0, 2, 1, 3)
    k = (x @ wk.T).reshape(B, L, n_kv_heads, head_dim).transpose(0, 2, 1, 3)
    v = (x @ wv.T).reshape(B, L, n_kv_heads, head_dim).transpose(0, 2, 1, 3)

    def repeat(a):
        a = jnp.concatenate([a[:, :, None]] * repeats, axis=2)
        return a.reshape(B, n_heads, L, head_dim)

    k, v = repeat(k), repeat(v)
    q = jnp.einsum('bhlj,lij->bhli', q, R)
    k = jnp.einsum('bhlj,lij->bhli', k, R)
    scores = jnp.matmul(q, k.transpose(0, 1, 3, 2)) * scale
    scores = scores + mask
    scores = jax.nn.softmax(scores.astype(jnp.float32), axis=-1)
    out = jnp.matmul(scores, v)
    out = out.transpose(0, 2, 1, 3).reshape(B, L, -1)
    return out @ wo.T, (k, v)


# ----------------------------------------------------------------------------
# Main
# ----------------------------------------------------------------------------
if __name__ == "__main__":
    # Small TransformerArgs-consistent config.  (Real configs use Hd in {128, 256} and large L,
    # which are lane-dense / (8,128)-aligned; the toy Hd=8 just exercises the full-dim block path.)
    B, L = 2, 8
    dim = 32
    n_heads = 4
    n_kv_heads = 2
    head_dim = 8
    rope_theta = 10000.0

    key = jax.random.PRNGKey(0)
    kx, kq, kk, kv_, ko = jax.random.split(key, 5)

    x = jax.random.normal(kx, (B, L, dim), dtype=jnp.float32)
    # torch.nn.Linear(in, out, bias=False) weight shape: (out, in)
    wq = jax.random.normal(kq, (n_heads * head_dim, dim), dtype=jnp.float32) * 0.05
    wk = jax.random.normal(kk, (n_kv_heads * head_dim, dim), dtype=jnp.float32) * 0.05
    wv = jax.random.normal(kv_, (n_kv_heads * head_dim, dim), dtype=jnp.float32) * 0.05
    wo = jax.random.normal(ko, (dim, n_heads * head_dim), dtype=jnp.float32) * 0.05
    weights = (wq, wk, wv, wo)

    positions = jnp.arange(L)
    rope_cos, rope_sin = create_rope_tables(positions, head_dim, rope_theta)

    out, (keys, values) = attention_forward(
        x, rope_cos, rope_sin, weights,
        n_heads=n_heads, n_kv_heads=n_kv_heads, head_dim=head_dim)
    out = jax.block_until_ready(out)
    keys = jax.block_until_ready(keys)
    values = jax.block_until_ready(values)

    # Reference uses the original dense rotation matrix + materialized causal mask.
    R = create_rotation_matrix(positions, head_dim, rope_theta)
    mask = create_additive_causal_mask(L)
    out_ref, (k_ref, v_ref) = reference_forward(
        x, R, mask, weights,
        n_heads=n_heads, n_kv_heads=n_kv_heads, head_dim=head_dim)

    assert np.allclose(np.asarray(out), np.asarray(out_ref), atol=2e-3, rtol=2e-3), "output mismatch"
    assert np.allclose(np.asarray(keys), np.asarray(k_ref), atol=1e-3, rtol=1e-3), "keys mismatch"
    assert np.allclose(np.asarray(values), np.asarray(v_ref), atol=1e-3, rtol=1e-3), "values mismatch"

    print("KERNEL_OK")
</pallas_src>

<mosaic_0001>
module attributes {stable_mosaic.version = 11 : i64} {
  func.func @_matmul_kernel(%arg0: i32, %arg1: i32, %arg2: i32, %arg3: memref<16x32xf32, #tpu.memory_space<vmem>>, %arg4: memref<32x32xf32, #tpu.memory_space<vmem>>, %arg5: memref<16x32xf32, #tpu.memory_space<vmem>>, %arg6: memref<16x32xf32, #tpu.memory_space<vmem>>) attributes {dimension_semantics = [#tpu.dimension_semantics<parallel>, #tpu.dimension_semantics<parallel>, #tpu.dimension_semantics<arbitrary>], iteration_bounds = array<i64: 1, 1, 1>, scalar_prefetch = 0 : i64, scratch_operands = 1 : i64, tpu.core_type = #tpu.core_type<tc>, window_params = [{transform_indices = @transform_0, window_bounds = array<i64: 16, 32>}, {transform_indices = @transform_1, window_bounds = array<i64: 32, 32>}, {transform_indices = @transform_2, window_bounds = array<i64: 16, 32>}]} {
    %c0_i32 = arith.constant 0 : i32
    %0 = arith.cmpi eq, %arg2, %c0_i32 : i32
    %1 = arith.extui %0 : i1 to i32
    %c0_i32_0 = arith.constant 0 : i32
    %2 = arith.cmpi ne, %1, %c0_i32_0 : i32
    scf.if %2 {
      %cst_10 = arith.constant 0.000000e+00 : f32
      %12 = vector.broadcast %cst_10 : f32 to vector<16x32xf32>
      %c0_11 = arith.constant 0 : index
      %c0_12 = arith.constant 0 : index
      %13 = vector.load %arg6[%c0_11, %c0_12] : memref<16x32xf32, #tpu.memory_space<vmem>>, vector<16x32xf32>
      tpu.vector_store %arg6[%c0_11, %c0_12], %12 {strides = array<i32>} : memref<16x32xf32, #tpu.memory_space<vmem>>, vector<16x32xf32>,
    } else {
    }
    %c0 = arith.constant 0 : index
    %c0_1 = arith.constant 0 : index
    %3 = vector.load %arg6[%c0, %c0_1] : memref<16x32xf32, #tpu.memory_space<vmem>>, vector<16x32xf32>
    %c0_2 = arith.constant 0 : index
    %c0_3 = arith.constant 0 : index
    %4 = vector.load %arg3[%c0_2, %c0_3] : memref<16x32xf32, #tpu.memory_space<vmem>>, vector<16x32xf32>
    %c0_4 = arith.constant 0 : index
    %c0_5 = arith.constant 0 : index
    %5 = vector.load %arg4[%c0_4, %c0_5] : memref<32x32xf32, #tpu.memory_space<vmem>>, vector<32x32xf32>
    %cst = arith.constant dense<0.000000e+00> : vector<16x32xf32>
    %6 = tpu.matmul %4, %5, %cst {dimension_numbers = #tpu.dot_dimension_numbers<[1], [1], [0], [0], [0, 0, 1, 0], [], []>} : vector<16x32xf32>, vector<32x32xf32>, vector<16x32xf32> -> vector<16x32xf32>
    %7 = arith.addf %3, %6 : vector<16x32xf32>
    %c0_6 = arith.constant 0 : index
    %c0_7 = arith.constant 0 : index
    %8 = vector.load %arg6[%c0_6, %c0_7] : memref<16x32xf32, #tpu.memory_space<vmem>>, vector<16x32xf32>
    tpu.vector_store %arg6[%c0_6, %c0_7], %7 {strides = array<i32>} : memref<16x32xf32, #tpu.memory_space<vmem>>, vector<16x32xf32>,
    %c0_i32_8 = arith.constant 0 : i32
    %9 = arith.cmpi eq, %arg2, %c0_i32_8 : i32
    %10 = arith.extui %9 : i1 to i32
    %c0_i32_9 = arith.constant 0 : i32
    %11 = arith.cmpi ne, %10, %c0_i32_9 : i32
    scf.if %11 {
      %c0_10 = arith.constant 0 : index
      %c0_11 = arith.constant 0 : index
      %12 = vector.load %arg6[%c0_10, %c0_11] : memref<16x32xf32, #tpu.memory_space<vmem>>, vector<16x32xf32>
      %c0_12 = arith.constant 0 : index
      %c0_13 = arith.constant 0 : index
      %13 = vector.load %arg5[%c0_12, %c0_13] : memref<16x32xf32, #tpu.memory_space<vmem>>, vector<16x32xf32>
      tpu.vector_store %arg5[%c0_12, %c0_13], %12 {strides = array<i32>} : memref<16x32xf32, #tpu.memory_space<vmem>>, vector<16x32xf32>,
    } else {
    }
    return
  }
  func.func @transform_0(%arg0: i32, %arg1: i32, %arg2: i32) -> (i32, i32) {
    %c0_i32 = arith.constant 0 : i32
    return %arg0, %arg2 : i32, i32
  }
  func.func @transform_1(%arg0: i32, %arg1: i32, %arg2: i32) -> (i32, i32) {
    %c0_i32 = arith.constant 0 : i32
    return %arg1, %arg2 : i32, i32
  }
  func.func @transform_2(%arg0: i32, %arg1: i32, %arg2: i32) -> (i32, i32) {
    %c0_i32 = arith.constant 0 : i32
    return %arg0, %arg1 : i32, i32
  }
}

</mosaic_0001>

<llo_original>
// kernel: tpu_custom_call.1
$region0: #{tpu_custom_call.1}
  #allocation0 [shape = 'u32[]', space=smem, size = 0x4, offset = 0x4, fixed_abs, tag = 'smem constant byte address 0x4 - core index']
  #allocation1 [shape = 'u32[144,128]{1,0:T(1,128)}', space=vmem, size = 0x12000, scoped, tag = 'internal scratch']
  #allocation2 [shape = 'f32[16,32]{1,0:T(8,128)}', space=vmem, size = 0x2000, scoped, tag = 'scratch operand']
  %s0 = inlined_call_operand.hbm [shape: f32[16,32], index: 0, kind: input, shape index: {}]
  %s1 = inlined_call_operand.hbm [shape: f32[32,32], index: 1, kind: input, shape index: {}]
  %s2 = inlined_call_operand.hbm [shape: f32[16,32], index: 2, kind: output, shape index: {}]
  %s3 = sld [smem:[#allocation0]]
  $region34: #{tpu_custom_call.1} parent=0
    _
  %s5 = ssub.s32 1, %s3
  %s6 = scalar_select 0, %s5, %s3
  $region1: #{tpu_custom_call.1} parent=0
    #allocation3 [shape = 'u8[8192]{0}', space=vmem, size = 0x2000, scoped, tag = 'input window, operand 0, single buffered']
    #allocation4 [shape = 's32[1]{0}', space=sflag, size = 0x4, scoped, tag = 'scoped memory for tpu_custom_call.1']
    #allocation5 [shape = 's32[1]{0}', space=sflag, size = 0x4, scoped, tag = 'scoped memory for tpu_custom_call.1']
    #allocation6 [shape = 'u8[16384]{0}', space=vmem, size = 0x4000, scoped, tag = 'input window, operand 1, single buffered']
    #allocation7 [shape = 's32[1]{0}', space=sflag, size = 0x4, scoped, tag = 'scoped memory for tpu_custom_call.1']
    #allocation8 [shape = 'u8[8192]{0}', space=vmem, size = 0x2000, scoped, tag = 'output window, operand 0, single buffered']
    %7 = vsyncpa [#allocation4], 0
    %8 = vsyncpa [#allocation7], 0
    %9 = vsyncpa [#allocation5], 0
    // Predicated region
    $region2: #{tpu_custom_call.1} parent=1 // pred_check
      _
    $region3: #{tpu_custom_call.1} parent=1 // pred_check_branch
      %11 = sbr.rel (0) target = $region5
    $region4: #{tpu_custom_call.1} parent=1 // pred_region
      %s13 = ssub.s32 256, 256
      %14 = vsyncadd [#allocation4], %s13
      %s15 = sshll.u32 [#allocation3], 4
      %s16 = int_to_ptr.vmem [resolvable:$true] %s15
      %21 = dma.hbm_to_vmem [thread:$0]  %s0, 256, %s16, [#allocation4], 128, 128, 8
    $region5: #{tpu_custom_call.1} parent=1 // pred_fallthru
      _
    // Predicated region
    $region6: #{tpu_custom_call.1} parent=1 // pred_check
      _
    $region7: #{tpu_custom_call.1} parent=1 // pred_check_branch
      %23 = sbr.rel (0) target = $region9
    $region8: #{tpu_custom_call.1} parent=1 // pred_region
      %s25 = ssub.s32 512, 512
      %26 = vsyncadd [#allocation7], %s25
      %s27 = sshll.u32 [#allocation6], 4
      %s28 = int_to_ptr.vmem [resolvable:$true] %s27
      %33 = dma.hbm_to_vmem [thread:$0]  %s1, 512, %s28, [#allocation7], 128, 128, 8
    $region9: #{tpu_custom_call.1} parent=1 // pred_fallthru
      _
    // Predicated region
    $region10: #{tpu_custom_call.1} parent=1 // pred_check
      _
    $region11: #{tpu_custom_call.1} parent=1 // pred_check_branch
      %35 = sbr.rel (0) target = $region13
    $region12: #{tpu_custom_call.1} parent=1 // pred_region
      %36 = dma.done [#allocation4], 256
    $region13: #{tpu_custom_call.1} parent=1 // pred_fallthru
      _
    // Predicated region
    $region14: #{tpu_custom_call.1} parent=1 // pred_check
      _
    $region15: #{tpu_custom_call.1} parent=1 // pred_check_branch
      %38 = sbr.rel (0) target = $region17
    $region16: #{tpu_custom_call.1} parent=1 // pred_region
      %39 = dma.done [#allocation7], 512
    $region17: #{tpu_custom_call.1} parent=1 // pred_fallthru
      _
    %p40 = scmp.eq.s32.totalorder 0, 0
    // Predicated region
    $region18: #{tpu_custom_call.1} parent=1 // pred_check
      %p41 = pneg %p40
    $region19: #{tpu_custom_call.1} parent=1 // pred_check_branch
      %43 = sbr.rel (%p41) target = $region21
    $region20: #{tpu_custom_call.1} parent=1 // pred_region
      %vm44 = vcmask 261120
      %45 = vst.msk [vmem:[#allocation2] sm:$0xff] %vm44, 0.0
      %46 = vst.msk [vmem:[#allocation2 + $0x8] sm:$0xff] %vm44, 0.0
    $region21: #{tpu_custom_call.1} parent=1 // pred_fallthru
      _
    %v47 = vld [vmem:[#allocation2] sm:$0xff]
    %v48 = vld [vmem:[#allocation2 + $0x8] sm:$0xff]
    %v49 = vld [vmem:[#allocation3] sm:$0xff]
    %v50 = vld [vmem:[#allocation3 + $0x8] sm:$0xff]
    %v51 = vld [vmem:[#allocation6] sm:$0xff]
    %v52 = vld [vmem:[#allocation6 + $0x8] sm:$0xff]
    %v53 = vld [vmem:[#allocation6 + $0x10] sm:$0xff]
    %v54 = vld [vmem:[#allocation6 + $0x18] sm:$0xff]
    %vm55 = vcmask 261120
    %v57 = vsel %vm55, %v49, 0
    %v60 = vsel %vm55, %v50, 0
    %v63 = vsel %vm55, %v51, 0
    %v66 = vsel %vm55, %v52, 0
    %v69 = vsel %vm55, %v53, 0
    %v72 = vsel %vm55, %v54, 0
    %74 = vmatprep.subr.mxu0 0.0
    %75 = vmatpush1.xpose.msra.mxu0 0.0
    %76 = vmatprep.subr.mxu0 0.0
    %77 = vmatpush1.xpose.msra.mxu0 0.0
    %78 = vmatprep.subr.mxu0 0.0
    %79 = vmatpush1.xpose.msra.mxu0 0.0
    %80 = vmatprep.subr.mxu0 0.0
    %81 = vmatpush1.xpose.msra.mxu0 0.0
    %82 = vmatprep.subr.mxu0 0.0
    %83 = vmatpush1.xpose.msra.mxu0 0.0
    %84 = vmatprep.subr.mxu0 0.0
    %85 = vmatpush1.xpose.msra.mxu0 0.0
    %86 = vmatprep.subr.mxu0 0.0
    %87 = vmatpush1.xpose.msra.mxu0 0.0
    %88 = vmatprep.subr.mxu0 0.0
    %89 = vmatpush1.xpose.msra.mxu0 0.0
    %90 = vmatprep.subr.mxu0 0.0
    %91 = vmatpush1.xpose.msra.mxu0 0.0
    %92 = vmatprep.subr.mxu0 0.0
    %93 = vmatpush1.xpose.msra.mxu0 0.0
    %94 = vmatprep.subr.mxu0 0.0
    %95 = vmatpush1.xpose.msra.mxu0 0.0
    %96 = vmatprep.subr.mxu0 0.0
    %97 = vmatpush1.xpose.msra.mxu0 0.0
    %98 = vmatprep.subr.mxu0 0.0
    %99 = vmatpush1.xpose.msra.mxu0 %v72
    %100 = vmatprep.subr.mxu0 0.0
    %101 = vmatpush1.xpose.msra.mxu0 %v69
    %102 = vmatprep.subr.mxu0 0.0
    %103 = vmatpush1.xpose.msra.mxu0 %v66
    %104 = vmatprep.subr.mxu0 0.0
    %105 = vmatpush1.xpose.msra.mxu0 %v63
    %106 = vmatprep.subr.mxu0 0.0
    %107 = vmatpush2.xpose.msra.mxu0 0.0
    %108 = vmatprep.subr.mxu0 0.0
    %109 = vmatpush2.xpose.msra.mxu0 0.0
    %110 = vmatprep.subr.mxu0 0.0
    %111 = vmatpush2.xpose.msra.mxu0 0.0
    %112 = vmatprep.subr.mxu0 0.0
    %113 = vmatpush2.xpose.msra.mxu0 0.0
    %114 = vmatprep.subr.mxu0 0.0
    %115 = vmatpush2.xpose.msra.mxu0 0.0
    %116 = vmatprep.subr.mxu0 0.0
    %117 = vmatpush2.xpose.msra.mxu0 0.0
    %118 = vmatprep.subr.mxu0 0.0
    %119 = vmatpush2.xpose.msra.mxu0 0.0
    %120 = vmatprep.subr.mxu0 0.0
    %121 = vmatpush2.xpose.msra.mxu0 0.0
    %122 = vmatprep.subr.mxu0 0.0
    %123 = vmatpush2.xpose.msra.mxu0 0.0
    %124 = vmatprep.subr.mxu0 0.0
    %125 = vmatpush2.xpose.msra.mxu0 0.0
    %126 = vmatprep.subr.mxu0 0.0
    %127 = vmatpush2.xpose.msra.mxu0 0.0
    %128 = vmatprep.subr.mxu0 0.0
    %129 = vmatpush2.xpose.msra.mxu0 0.0
    %130 = vmatprep.subr.mxu0 0.0
    %131 = vmatpush2.xpose.msra.mxu0 0.0
    %132 = vmatprep.subr.mxu0 0.0
    %133 = vmatpush2.xpose.msra.mxu0 0.0
    %134 = vmatprep.subr.mxu0 0.0
    %135 = vmatpush2.xpose.msra.mxu0 0.0
    %136 = vmatprep.subr.mxu0 0.0
    %137 = vmatpush2.xpose.msra.mxu0 0.0
    %138 = vmatprep.mubr.f32.mxu0 0.0
    %139 = vmatmul.mubr.f32.gmra.mxu0 %v57
    %v140 = vpop.f32.mrf.mxu0
    %v141 = vadd.f32 0.0, %v140
    %v142 = vpop.f32.mrf.mxu0
    %143 = vmatprep.mubr.f32.mxu0 0.0
    %144 = vmatmul.mubr.f32.gmra.mxu0 %v60
    %v145 = vpop.f32.mrf.mxu0
    %v146 = vadd.f32 0.0, %v145
    %v147 = vpop.f32.mrf.mxu0
    %148 = vdwg.mxu0
    %v149 = vadd.f32 %v47, %v141
    %v150 = vadd.f32 %v48, %v146
    %151 = vst.msk [vmem:[#allocation2] sm:$0xff] %vm55, %v149
    %152 = vst.msk [vmem:[#allocation2 + $0x8] sm:$0xff] %vm55, %v150
    // Predicated region
    $region22: #{tpu_custom_call.1} parent=1 // pred_check
      %p153 = pneg %p40
    $region23: #{tpu_custom_call.1} parent=1 // pred_check_branch
      %155 = sbr.rel (%p153) target = $region25
    $region24: #{tpu_custom_call.1} parent=1 // pred_region
      %v156 = vld [vmem:[#allocation2] sm:$0xff]
      %v157 = vld [vmem:[#allocation2 + $0x8] sm:$0xff]
      %158 = vst.msk [vmem:[#allocation8] sm:$0xff] %vm55, %v156
      %159 = vst.msk [vmem:[#allocation8 + $0x8] sm:$0xff] %vm55, %v157
    $region25: #{tpu_custom_call.1} parent=1 // pred_fallthru
      _
    // Predicated region
    $region26: #{tpu_custom_call.1} parent=1 // pred_check
      _
    $region27: #{tpu_custom_call.1} parent=1 // pred_check_branch
      %161 = sbr.rel (0) target = $region29
    $region28: #{tpu_custom_call.1} parent=1 // pred_region
      %s163 = ssub.s32 256, 256
      %164 = vsyncadd [#allocation5], %s163
      %s165 = sshll.u32 [#allocation8], 4
      %s166 = int_to_ptr.vmem [resolvable:$true] %s165
      %171 = dma.vmem_to_hbm [thread:$0]  %s166, 256, %s2, [#allocation5], 128, 128, 8
    $region29: #{tpu_custom_call.1} parent=1 // pred_fallthru
      _
    // Predicated region
    $region30: #{tpu_custom_call.1} parent=1 // pred_check
      _
    $region31: #{tpu_custom_call.1} parent=1 // pred_check_branch
      %173 = sbr.rel (0) target = $region33
    $region32: #{tpu_custom_call.1} parent=1 // pred_region
      %174 = dma.done [#allocation5], 256
    $region33: #{tpu_custom_call.1} parent=1 // pred_fallthru
      _
    %175 = vsyncpa [#allocation4], 1
    %176 = vsyncpa [#allocation7], 1
    %177 = vsyncpa [#allocation5], 1

</llo_original>
